<compile_context>
chip_gen: v5e
topology: v5e:2x2
jax: 0.10.0
libtpu: 0.0.40
codegen_flags: <defaults>
</compile_context>

<pallas_src>
import functools
import math

import jax
import jax.numpy as jnp
from jax.experimental import pallas as pl
from jax.experimental.pallas import tpu as pltpu


# ------------------------------ fused kernel -------------------------------

def _encoder_layer_kernel(emb_ref, mask_ref, eg_ref, eb_ref,
                          wqkv_ref, wo_ref, w1_ref, w2_ref, vec_ref,
                          pooled_ref, x_ref,
                          *, num_heads, head_dim, eps):
    """grid = (batch, layer); one program = one transformer layer for one
    batch element.  The residual stream lives in the x_ref VMEM scratch and is
    carried across the layer axis (the last / fastest grid axis)."""
    l = pl.program_id(1)
    n_layers = pl.num_programs(1)

    S = emb_ref.shape[1]
    H = wqkv_ref.shape[1]
    I = w1_ref.shape[2]
    nH, Dh = num_heads, head_dim

    def ln(v, g, b):                     # layernorm math kept in f32 (v5e-safe)
        mu = jnp.mean(v, axis=-1, keepdims=True)
        var = jnp.mean(jnp.square(v - mu), axis=-1, keepdims=True)
        return (v - mu) * jax.lax.rsqrt(var + eps) * g + b

    def mm(a, w):                        # bf16 MXU inputs, f32 accumulation
        return jnp.dot(a.astype(jnp.bfloat16), w.astype(jnp.bfloat16),
                       preferred_element_type=jnp.float32)

    # ---- first layer: initialise residual stream (embeddings + LN) ----
    @pl.when(l == 0)
    def _():
        x_ref[...] = ln(emb_ref[0], eg_ref[...], eb_ref[...])

    x = x_ref[...]                                        # (S, H) f32

    # packed per-layer vectors: [bqkv | bo | ln1_g | ln1_b | b1 | b2 | ln2_g | ln2_b]
    vecs = vec_ref[0]                                     # (8, P) f32
    bqkv  = vecs[0:1, :3 * H]
    bo    = vecs[1:2, :H]
    ln1_g = vecs[2:3, :H]
    ln1_b = vecs[3:4, :H]
    b1    = vecs[4:5, :I]
    b2    = vecs[5:6, :H]
    ln2_g = vecs[6:7, :H]
    ln2_b = vecs[7:8, :H]

    # ---- fused QKV projection (1/sqrt(Dh) already folded into the Q third) ----
    qkv = mm(x, wqkv_ref[0]) + bqkv                       # (S, 3H) f32

    # ---- batched multi-head attention (heads as the leading batch dim) ----
    def split_heads(m):                                   # (S, H) -> (nH, S, Dh)
        return jnp.stack([m[:, h * Dh:(h + 1) * Dh] for h in range(nH)], axis=0)

    qh = split_heads(qkv[:, :H]).astype(jnp.bfloat16)
    kh = split_heads(qkv[:, H:2 * H]).astype(jnp.bfloat16)
    vh = split_heads(qkv[:, 2 * H:]).astype(jnp.bfloat16)

    s = jnp.einsum('hqd,hkd->hqk', qh, kh,
                   preferred_element_type=jnp.float32)    # (nH, S, S)
    s = s + mask_ref[0][None]                             # additive key mask (once)
    s = s - jnp.max(s, axis=-1, keepdims=True)            # stable softmax, f32
    p = jnp.exp(s)
    p = p * pl.reciprocal(jnp.sum(p, axis=-1, keepdims=True), approx=True)
    ctx = jnp.einsum('hqk,hkd->hqd', p.astype(jnp.bfloat16), vh,
                     preferred_element_type=jnp.float32)  # (nH, S, Dh)
    ctx = jnp.concatenate([ctx[h] for h in range(nH)], axis=-1)   # (S, H)

    # ---- attention out-proj + residual + LN ----
    attn_out = mm(ctx, wo_ref[0]) + bo
    x = ln(x + attn_out, ln1_g, ln1_b)

    # ---- FFN + residual + LN (tanh GELU -> single EUP op per element) ----
    hmid = jax.nn.gelu(mm(x, w1_ref[0]) + b1, approximate=True)
    ffn = mm(hmid, w2_ref[0]) + b2
    x = ln(x + ffn, ln2_g, ln2_b)

    x_ref[...] = x                                        # carry to next layer

    # ---- last layer: emit pooled CLS row (classifier runs batched in XLA) ----
    @pl.when(l == n_layers - 1)
    def _():
        pooled_ref[0] = x[0:1, :].astype(pooled_ref.dtype)


# --------------------------- parameter synthesis ---------------------------

CFG = dict(
    vocab_size=100,
    hidden_size=32,
    num_layers=2,
    num_heads=2,
    intermediate_size=64,
    max_position=16,
    type_vocab_size=2,
    initializer_range=0.02,
)


def pack_layer_vectors(bqkv, bo, ln1_g, ln1_b, b1, b2, ln2_g, ln2_b):
    """Pack the eight small per-layer vectors into one (L, 8, P) slab so the
    kernel takes a single DMA / BlockSpec instead of eight tiny ones."""
    rows = (bqkv, bo, ln1_g, ln1_b, b1, b2, ln2_g, ln2_b)
    P = max(v.shape[-1] for v in rows)

    def row(v):
        return jnp.pad(v, ((0, 0), (0, P - v.shape[-1])))

    return jnp.stack([row(v) for v in rows], axis=1)      # (L, 8, P)


def init_params(key, cfg):
    H = cfg["hidden_size"]
    I = cfg["intermediate_size"]
    L = cfg["num_layers"]
    Dh = H // cfg["num_heads"]
    std = cfg["initializer_range"]
    scale = 1.0 / math.sqrt(Dh)

    def nrm(k, shape):
        return std * jax.random.normal(k, shape, dtype=jnp.float32)

    keys = iter(jax.random.split(key, 12))

    wqkv = nrm(next(keys), (L, H, 3 * H))
    wqkv = wqkv.at[:, :, :H].multiply(scale)      # fold 1/sqrt(Dh) into Q weights
    bqkv = jnp.zeros((L, 3 * H), jnp.float32)
    bqkv = bqkv.at[:, :H].multiply(scale)         # ...and into the Q bias

    return {
        "word_emb": nrm(next(keys), (cfg["vocab_size"], H)),
        "pos_emb": nrm(next(keys), (cfg["max_position"], H)),
        "type_emb": nrm(next(keys), (cfg["type_vocab_size"], H)),
        "emb_ln_g": jnp.ones((1, H), jnp.float32),
        "emb_ln_b": jnp.zeros((1, H), jnp.float32),
        # bf16 per-layer weight stacks fed to the MXU (f32 accumulate in-kernel)
        # TODO(synk): on v7x, fp8 weights + per-channel scales would halve weight
        # DMA/VMEM; kept bf16 here for v5e/v6e portability.
        "wqkv": wqkv.astype(jnp.bfloat16),
        "wo": nrm(next(keys), (L, H, H)).astype(jnp.bfloat16),
        "w1": nrm(next(keys), (L, H, I)).astype(jnp.bfloat16),
        "w2": nrm(next(keys), (L, I, H)).astype(jnp.bfloat16),
        "layer_vec": pack_layer_vectors(
            bqkv,
            jnp.zeros((L, H), jnp.float32),       # bo
            jnp.ones((L, H), jnp.float32),        # ln1_g
            jnp.zeros((L, H), jnp.float32),       # ln1_b
            jnp.zeros((L, I), jnp.float32),       # b1
            jnp.zeros((L, H), jnp.float32),       # b2
            jnp.ones((L, H), jnp.float32),        # ln2_g
            jnp.zeros((L, H), jnp.float32),       # ln2_b
        ),
        "cls_w": nrm(next(keys), (H, H)),
        "cls_b": jnp.zeros((H,), jnp.float32),
    }


# ------------------------------ forward pass -------------------------------

def rank_encoder_forward(params, input_ids, attention_mask=None,
                         token_type_ids=None, *, cfg):
    B, S = input_ids.shape
    H = cfg["hidden_size"]
    nH = cfg["num_heads"]
    Dh = H // nH
    I = cfg["intermediate_size"]
    L = cfg["num_layers"]
    P = params["layer_vec"].shape[-1]

    if attention_mask is None:
        attention_mask = jnp.ones((B, S), jnp.int32)
    if token_type_ids is None:
        token_type_ids = jnp.zeros((B, S), jnp.int32)

    # ---- embeddings (gather is XLA glue; everything after is one kernel) ----
    pos_ids = jnp.arange(S, dtype=jnp.int32)
    emb = (jnp.take(params["word_emb"], input_ids, axis=0)
           + jnp.take(params["pos_emb"], pos_ids, axis=0)[None, :, :]
           + jnp.take(params["type_emb"], token_type_ids, axis=0))   # (B,S,H)

    add_mask = ((1.0 - attention_mask.astype(jnp.float32)) * -10000.0
                ).reshape(B, 1, S)

    kernel = functools.partial(_encoder_layer_kernel,
                               num_heads=nH, head_dim=Dh, eps=1e-12)

    in_specs = [
        pl.BlockSpec((1, S, H), lambda b, l: (b, 0, 0)),       # embeddings
        pl.BlockSpec((1, 1, S), lambda b, l: (b, 0, 0)),       # additive mask
        pl.BlockSpec((1, H), lambda b, l: (0, 0)),             # emb LN gamma
        pl.BlockSpec((1, H), lambda b, l: (0, 0)),             # emb LN beta
        pl.BlockSpec((1, H, 3 * H), lambda b, l: (l, 0, 0)),   # fused QKV (layer l)
        pl.BlockSpec((1, H, H), lambda b, l: (l, 0, 0)),       # attention out-proj
        pl.BlockSpec((1, H, I), lambda b, l: (l, 0, 0)),       # FFN up
        pl.BlockSpec((1, I, H), lambda b, l: (l, 0, 0)),       # FFN down
        pl.BlockSpec((1, 8, P), lambda b, l: (l, 0, 0)),       # packed bias/LN vecs
    ]

    pooled = pl.pallas_call(
        kernel,
        out_shape=jax.ShapeDtypeStruct((B, 1, H), jnp.float32),
        grid=(B, L),
        in_specs=in_specs,
        out_specs=pl.BlockSpec((1, 1, H), lambda b, l: (b, 0, 0)),
        scratch_shapes=[pltpu.VMEM((S, H), jnp.float32)],      # residual stream
        compiler_params=pltpu.CompilerParams(
            dimension_semantics=("parallel", "arbitrary"),
            vmem_limit_bytes=48 * 1024 * 1024),
    )(emb, add_mask, params["emb_ln_g"], params["emb_ln_b"],
      params["wqkv"], params["wo"], params["w1"], params["w2"],
      params["layer_vec"])

    # CLS pooling happened in-kernel; dropout is eval-mode identity.
    # Classifier batched across B in XLA (per perf review).
    pooled = pooled[:, 0, :]                                   # (B, H)
    logits = jnp.dot(pooled, params["cls_w"]) + params["cls_b"]
    return logits


# ----------------------------------- main -----------------------------------

if __name__ == "__main__":
    key = jax.random.PRNGKey(0)
    k_param, k_ids = jax.random.split(key)

    B, S = 2, 8
    params = init_params(k_param, CFG)

    input_ids = jax.random.randint(k_ids, (B, S), 0, CFG["vocab_size"],
                                   dtype=jnp.int32)
    attention_mask = jnp.concatenate(
        [jnp.ones((B, S - 2), jnp.int32), jnp.zeros((B, 2), jnp.int32)], axis=1)
    token_type_ids = jnp.zeros((B, S), jnp.int32)

    forward = jax.jit(functools.partial(rank_encoder_forward, cfg=CFG))
    logits = forward(params, input_ids, attention_mask, token_type_ids)
    jax.block_until_ready(logits)
    assert logits.shape == (B, CFG["hidden_size"])
    assert bool(jnp.all(jnp.isfinite(logits)))
    print("KERNEL_OK")
</pallas_src>

<mosaic_0001>
module attributes {stable_mosaic.version = 11 : i64} {
  func.func @_encoder_layer_kernel(%arg0: i32, %arg1: i32, %arg2: memref<1x8x32xf32, #tpu.memory_space<vmem>>, %arg3: memref<1x1x8xf32, #tpu.memory_space<vmem>>, %arg4: memref<1x32xf32, #tpu.memory_space<vmem>>, %arg5: memref<1x32xf32, #tpu.memory_space<vmem>>, %arg6: memref<1x32x96xbf16, #tpu.memory_space<vmem>>, %arg7: memref<1x32x32xbf16, #tpu.memory_space<vmem>>, %arg8: memref<1x32x64xbf16, #tpu.memory_space<vmem>>, %arg9: memref<1x64x32xbf16, #tpu.memory_space<vmem>>, %arg10: memref<1x8x96xf32, #tpu.memory_space<vmem>>, %arg11: memref<1x1x32xf32, #tpu.memory_space<vmem>>, %arg12: memref<8x32xf32, #tpu.memory_space<vmem>>) attributes {dimension_semantics = [#tpu.dimension_semantics<parallel>, #tpu.dimension_semantics<arbitrary>], iteration_bounds = array<i64: 2, 2>, scalar_prefetch = 0 : i64, scratch_operands = 1 : i64, tpu.core_type = #tpu.core_type<tc>, window_params = [{transform_indices = @transform_0, window_bounds = array<i64: 1, 8, 32>}, {transform_indices = @transform_1, window_bounds = array<i64: 1, 1, 8>}, {pipeline_mode = #tpu.pipeline_mode<synchronous>, transform_indices = @transform_2, window_bounds = array<i64: 1, 32>}, {pipeline_mode = #tpu.pipeline_mode<synchronous>, transform_indices = @transform_3, window_bounds = array<i64: 1, 32>}, {transform_indices = @transform_4, window_bounds = array<i64: 1, 32, 96>}, {transform_indices = @transform_5, window_bounds = array<i64: 1, 32, 32>}, {transform_indices = @transform_6, window_bounds = array<i64: 1, 32, 64>}, {transform_indices = @transform_7, window_bounds = array<i64: 1, 64, 32>}, {transform_indices = @transform_8, window_bounds = array<i64: 1, 8, 96>}, {transform_indices = @transform_9, window_bounds = array<i64: 1, 1, 32>}]} {
    %c0_i32 = arith.constant 0 : i32
    %0 = arith.cmpi eq, %arg1, %c0_i32 : i32
    %1 = arith.extui %0 : i1 to i32
    %c0_i32_0 = arith.constant 0 : i32
    %2 = arith.cmpi ne, %1, %c0_i32_0 : i32
    scf.if %2 {
      %c0_44 = arith.constant 0 : index
      %c0_45 = arith.constant 0 : index
      %c0_46 = arith.constant 0 : index
      %145 = vector.load %arg2[%c0_44, %c0_45, %c0_46] : memref<1x8x32xf32, #tpu.memory_space<vmem>>, vector<1x8x32xf32>
      %146 = vector.shape_cast %145 : vector<1x8x32xf32> to vector<8x32xf32>
      %c0_47 = arith.constant 0 : index
      %c0_48 = arith.constant 0 : index
      %147 = vector.load %arg4[%c0_47, %c0_48] : memref<1x32xf32, #tpu.memory_space<vmem>>, vector<1x32xf32>
      %c0_49 = arith.constant 0 : index
      %c0_50 = arith.constant 0 : index
      %148 = vector.load %arg5[%c0_49, %c0_50] : memref<1x32xf32, #tpu.memory_space<vmem>>, vector<1x32xf32>
      %cst_51 = arith.constant dense<0.000000e+00> : vector<8xf32>
      %149 = vector.multi_reduction <add>, %146, %cst_51 [1] : vector<8x32xf32> to vector<8xf32>
      %150 = vector.shape_cast %149 : vector<8xf32> to vector<8x1xf32>
      %cst_52 = arith.constant 3.200000e+01 : f32
      %151 = vector.broadcast %cst_52 : f32 to vector<8x1xf32>
      %152 = arith.divf %150, %151 : vector<8x1xf32>
      %153 = vector.broadcast %152 : vector<8x1xf32> to vector<8x32xf32>
      %154 = arith.subf %146, %153 : vector<8x32xf32>
      %155 = arith.mulf %154, %154 : vector<8x32xf32>
      %cst_53 = arith.constant dense<0.000000e+00> : vector<8xf32>
      %156 = vector.multi_reduction <add>, %155, %cst_53 [1] : vector<8x32xf32> to vector<8xf32>
      %157 = vector.shape_cast %156 : vector<8xf32> to vector<8x1xf32>
      %cst_54 = arith.constant 3.200000e+01 : f32
      %158 = vector.broadcast %cst_54 : f32 to vector<8x1xf32>
      %159 = arith.divf %157, %158 : vector<8x1xf32>
      %160 = vector.broadcast %152 : vector<8x1xf32> to vector<8x32xf32>
      %161 = arith.subf %146, %160 : vector<8x32xf32>
      %cst_55 = arith.constant 9.99999996E-13 : f32
      %162 = vector.broadcast %cst_55 : f32 to vector<8x1xf32>
      %163 = arith.addf %159, %162 : vector<8x1xf32>
      %164 = math.rsqrt %163 : vector<8x1xf32>
      %165 = vector.broadcast %164 : vector<8x1xf32> to vector<8x32xf32>
      %166 = arith.mulf %161, %165 : vector<8x32xf32>
      %167 = vector.broadcast %147 : vector<1x32xf32> to vector<8x32xf32>
      %168 = arith.mulf %166, %167 : vector<8x32xf32>
      %169 = vector.broadcast %148 : vector<1x32xf32> to vector<8x32xf32>
      %170 = arith.addf %168, %169 : vector<8x32xf32>
      %c0_56 = arith.constant 0 : index
      %c0_57 = arith.constant 0 : index
      %171 = vector.load %arg12[%c0_56, %c0_57] : memref<8x32xf32, #tpu.memory_space<vmem>>, vector<8x32xf32>
      tpu.vector_store %arg12[%c0_56, %c0_57], %170 {strides = array<i32>} : memref<8x32xf32, #tpu.memory_space<vmem>>, vector<8x32xf32>,
    } else {
    }
    %c0 = arith.constant 0 : index
    %c0_1 = arith.constant 0 : index
    %3 = vector.load %arg12[%c0, %c0_1] : memref<8x32xf32, #tpu.memory_space<vmem>>, vector<8x32xf32>
    %c0_2 = arith.constant 0 : index
    %c0_3 = arith.constant 0 : index
    %c0_4 = arith.constant 0 : index
    %4 = vector.load %arg10[%c0_2, %c0_3, %c0_4] : memref<1x8x96xf32, #tpu.memory_space<vmem>>, vector<1x8x96xf32>
    %5 = vector.shape_cast %4 : vector<1x8x96xf32> to vector<8x96xf32>
    %6 = vector.extract_strided_slice %5 {offsets = [0, 0], sizes = [1, 96], strides = [1, 1]} : vector<8x96xf32> to vector<1x96xf32>
    %7 = vector.extract_strided_slice %5 {offsets = [1, 0], sizes = [1, 32], strides = [1, 1]} : vector<8x96xf32> to vector<1x32xf32>
    %8 = vector.extract_strided_slice %5 {offsets = [2, 0], sizes = [1, 32], strides = [1, 1]} : vector<8x96xf32> to vector<1x32xf32>
    %9 = vector.extract_strided_slice %5 {offsets = [3, 0], sizes = [1, 32], strides = [1, 1]} : vector<8x96xf32> to vector<1x32xf32>
    %10 = vector.extract_strided_slice %5 {offsets = [4, 0], sizes = [1, 64], strides = [1, 1]} : vector<8x96xf32> to vector<1x64xf32>
    %11 = vector.extract_strided_slice %5 {offsets = [5, 0], sizes = [1, 32], strides = [1, 1]} : vector<8x96xf32> to vector<1x32xf32>
    %12 = vector.extract_strided_slice %5 {offsets = [6, 0], sizes = [1, 32], strides = [1, 1]} : vector<8x96xf32> to vector<1x32xf32>
    %13 = vector.extract_strided_slice %5 {offsets = [7, 0], sizes = [1, 32], strides = [1, 1]} : vector<8x96xf32> to vector<1x32xf32>
    %c0_5 = arith.constant 0 : index
    %c0_6 = arith.constant 0 : index
    %c0_7 = arith.constant 0 : index
    %14 = vector.load %arg6[%c0_5, %c0_6, %c0_7] : memref<1x32x96xbf16, #tpu.memory_space<vmem>>, vector<1x32x96xbf16>
    %15 = vector.shape_cast %14 : vector<1x32x96xbf16> to vector<32x96xbf16>
    %16 = arith.truncf %3 : vector<8x32xf32> to vector<8x32xbf16>
    %cst = arith.constant dense<0.000000e+00> : vector<8x96xf32>
    %17 = tpu.matmul %16, %15, %cst {dimension_numbers = #tpu.dot_dimension_numbers<[1], [0], [0], [1], [0, 0, 1, 1], [], []>} : vector<8x32xbf16>, vector<32x96xbf16>, vector<8x96xf32> -> vector<8x96xf32>
    %18 = vector.broadcast %6 : vector<1x96xf32> to vector<8x96xf32>
    %19 = arith.addf %17, %18 : vector<8x96xf32>
    %20 = vector.extract_strided_slice %19 {offsets = [0, 0], sizes = [8, 32], strides = [1, 1]} : vector<8x96xf32> to vector<8x32xf32>
    %21 = vector.extract_strided_slice %20 {offsets = [0, 0], sizes = [8, 16], strides = [1, 1]} : vector<8x32xf32> to vector<8x16xf32>
    %22 = vector.extract_strided_slice %20 {offsets = [0, 16], sizes = [8, 16], strides = [1, 1]} : vector<8x32xf32> to vector<8x16xf32>
    %23 = vector.shape_cast %21 : vector<8x16xf32> to vector<1x8x16xf32>
    %24 = vector.shape_cast %22 : vector<8x16xf32> to vector<1x8x16xf32>
    %25 = tpu.concatenate %23, %24 in 0 : vector<1x8x16xf32>, vector<1x8x16xf32> -> vector<2x8x16xf32>
    %26 = arith.truncf %25 : vector<2x8x16xf32> to vector<2x8x16xbf16>
    %27 = vector.extract_strided_slice %19 {offsets = [0, 32], sizes = [8, 32], strides = [1, 1]} : vector<8x96xf32> to vector<8x32xf32>
    %28 = vector.extract_strided_slice %27 {offsets = [0, 0], sizes = [8, 16], strides = [1, 1]} : vector<8x32xf32> to vector<8x16xf32>
    %29 = vector.extract_strided_slice %27 {offsets = [0, 16], sizes = [8, 16], strides = [1, 1]} : vector<8x32xf32> to vector<8x16xf32>
    %30 = vector.shape_cast %28 : vector<8x16xf32> to vector<1x8x16xf32>
    %31 = vector.shape_cast %29 : vector<8x16xf32> to vector<1x8x16xf32>
    %32 = tpu.concatenate %30, %31 in 0 : vector<1x8x16xf32>, vector<1x8x16xf32> -> vector<2x8x16xf32>
    %33 = arith.truncf %32 : vector<2x8x16xf32> to vector<2x8x16xbf16>
    %34 = vector.extract_strided_slice %19 {offsets = [0, 64], sizes = [8, 32], strides = [1, 1]} : vector<8x96xf32> to vector<8x32xf32>
    %35 = vector.extract_strided_slice %34 {offsets = [0, 0], sizes = [8, 16], strides = [1, 1]} : vector<8x32xf32> to vector<8x16xf32>
    %36 = vector.extract_strided_slice %34 {offsets = [0, 16], sizes = [8, 16], strides = [1, 1]} : vector<8x32xf32> to vector<8x16xf32>
    %37 = vector.shape_cast %35 : vector<8x16xf32> to vector<1x8x16xf32>
    %38 = vector.shape_cast %36 : vector<8x16xf32> to vector<1x8x16xf32>
    %39 = tpu.concatenate %37, %38 in 0 : vector<1x8x16xf32>, vector<1x8x16xf32> -> vector<2x8x16xf32>
    %40 = arith.truncf %39 : vector<2x8x16xf32> to vector<2x8x16xbf16>
    "tpu.trace_start"() <{level = 10 : i32, message = "hqd,hkd->hqk"}> : () -> ()
    %cst_8 = arith.constant dense<0.000000e+00> : vector<2x8x8xf32>
    %41 = tpu.matmul %26, %33, %cst_8 {dimension_numbers = #tpu.dot_dimension_numbers<[2], [2], [1], [1], [0, 0, 0, 1, 1, 1], [0], [0]>} : vector<2x8x16xbf16>, vector<2x8x16xbf16>, vector<2x8x8xf32> -> vector<2x8x8xf32>
    "tpu.trace_stop"() : () -> ()
    %c0_9 = arith.constant 0 : index
    %c0_10 = arith.constant 0 : index
    %c0_11 = arith.constant 0 : index
    %42 = vector.load %arg3[%c0_9, %c0_10, %c0_11] : memref<1x1x8xf32, #tpu.memory_space<vmem>>, vector<1x1x8xf32>
    %43 = vector.shape_cast %42 : vector<1x1x8xf32> to vector<1x8xf32>
    %44 = vector.shape_cast %43 : vector<1x8xf32> to vector<1x1x8xf32>
    %45 = vector.broadcast %44 : vector<1x1x8xf32> to vector<2x8x8xf32>
    %46 = arith.addf %41, %45 : vector<2x8x8xf32>
    %cst_12 = arith.constant dense<0xFF800000> : vector<2x8xf32>
    %47 = vector.multi_reduction <maximumf>, %46, %cst_12 [2] : vector<2x8x8xf32> to vector<2x8xf32>
    %48 = vector.shape_cast %47 : vector<2x8xf32> to vector<2x8x1xf32>
    %49 = vector.broadcast %48 : vector<2x8x1xf32> to vector<2x8x8xf32>
    %50 = arith.subf %46, %49 : vector<2x8x8xf32>
    %51 = math.exp %50 : vector<2x8x8xf32>
    %cst_13 = arith.constant dense<0.000000e+00> : vector<2x8xf32>
    %52 = vector.multi_reduction <add>, %51, %cst_13 [2] : vector<2x8x8xf32> to vector<2x8xf32>
    %53 = vector.shape_cast %52 : vector<2x8xf32> to vector<2x8x1xf32>
    %54 = tpu.reciprocal %53 {approx = true} : vector<2x8x1xf32> -> vector<2x8x1xf32>
    %55 = vector.broadcast %54 : vector<2x8x1xf32> to vector<2x8x8xf32>
    %56 = arith.mulf %51, %55 : vector<2x8x8xf32>
    %57 = arith.truncf %56 : vector<2x8x8xf32> to vector<2x8x8xbf16>
    "tpu.trace_start"() <{level = 10 : i32, message = "hqk,hkd->hqd"}> : () -> ()
    %cst_14 = arith.constant dense<0.000000e+00> : vector<2x8x16xf32>
    %58 = tpu.matmul %57, %40, %cst_14 {dimension_numbers = #tpu.dot_dimension_numbers<[2], [1], [1], [2], [0, 0, 0, 1, 1, 2], [0], [0]>} : vector<2x8x8xbf16>, vector<2x8x16xbf16>, vector<2x8x16xf32> -> vector<2x8x16xf32>
    "tpu.trace_stop"() : () -> ()
    %59 = vector.extract_strided_slice %58 {offsets = [0, 0, 0], sizes = [1, 8, 16], strides = [1, 1, 1]} : vector<2x8x16xf32> to vector<1x8x16xf32>
    %60 = vector.shape_cast %59 : vector<1x8x16xf32> to vector<8x16xf32>
    %61 = vector.extract_strided_slice %58 {offsets = [1, 0, 0], sizes = [1, 8, 16], strides = [1, 1, 1]} : vector<2x8x16xf32> to vector<1x8x16xf32>
    %62 = vector.shape_cast %61 : vector<1x8x16xf32> to vector<8x16xf32>
    %63 = tpu.concatenate %60, %62 in 1 : vector<8x16xf32>, vector<8x16xf32> -> vector<8x32xf32>
    %c0_15 = arith.constant 0 : index
    %c0_16 = arith.constant 0 : index
    %c0_17 = arith.constant 0 : index
    %64 = vector.load %arg7[%c0_15, %c0_16, %c0_17] : memref<1x32x32xbf16, #tpu.memory_space<vmem>>, vector<1x32x32xbf16>
    %65 = vector.shape_cast %64 : vector<1x32x32xbf16> to vector<32x32xbf16>
    %66 = arith.truncf %63 : vector<8x32xf32> to vector<8x32xbf16>
    %cst_18 = arith.constant dense<0.000000e+00> : vector<8x32xf32>
    %67 = tpu.matmul %66, %65, %cst_18 {dimension_numbers = #tpu.dot_dimension_numbers<[1], [0], [0], [1], [0, 0, 1, 1], [], []>} : vector<8x32xbf16>, vector<32x32xbf16>, vector<8x32xf32> -> vector<8x32xf32>
    %68 = vector.broadcast %7 : vector<1x32xf32> to vector<8x32xf32>
    %69 = arith.addf %67, %68 : vector<8x32xf32>
    %70 = arith.addf %3, %69 : vector<8x32xf32>
    %cst_19 = arith.constant dense<0.000000e+00> : vector<8xf32>
    %71 = vector.multi_reduction <add>, %70, %cst_19 [1] : vector<8x32xf32> to vector<8xf32>
    %72 = vector.shape_cast %71 : vector<8xf32> to vector<8x1xf32>
    %cst_20 = arith.constant 3.200000e+01 : f32
    %73 = vector.broadcast %cst_20 : f32 to vector<8x1xf32>
    %74 = arith.divf %72, %73 : vector<8x1xf32>
    %75 = vector.broadcast %74 : vector<8x1xf32> to vector<8x32xf32>
    %76 = arith.subf %70, %75 : vector<8x32xf32>
    %77 = arith.mulf %76, %76 : vector<8x32xf32>
    %cst_21 = arith.constant dense<0.000000e+00> : vector<8xf32>
    %78 = vector.multi_reduction <add>, %77, %cst_21 [1] : vector<8x32xf32> to vector<8xf32>
    %79 = vector.shape_cast %78 : vector<8xf32> to vector<8x1xf32>
    %cst_22 = arith.constant 3.200000e+01 : f32
    %80 = vector.broadcast %cst_22 : f32 to vector<8x1xf32>
    %81 = arith.divf %79, %80 : vector<8x1xf32>
    %82 = vector.broadcast %74 : vector<8x1xf32> to vector<8x32xf32>
    %83 = arith.subf %70, %82 : vector<8x32xf32>
    %cst_23 = arith.constant 9.99999996E-13 : f32
    %84 = vector.broadcast %cst_23 : f32 to vector<8x1xf32>
    %85 = arith.addf %81, %84 : vector<8x1xf32>
    %86 = math.rsqrt %85 : vector<8x1xf32>
    %87 = vector.broadcast %86 : vector<8x1xf32> to vector<8x32xf32>
    %88 = arith.mulf %83, %87 : vector<8x32xf32>
    %89 = vector.broadcast %8 : vector<1x32xf32> to vector<8x32xf32>
    %90 = arith.mulf %88, %89 : vector<8x32xf32>
    %91 = vector.broadcast %9 : vector<1x32xf32> to vector<8x32xf32>
    %92 = arith.addf %90, %91 : vector<8x32xf32>
    %c0_24 = arith.constant 0 : index
    %c0_25 = arith.constant 0 : index
    %c0_26 = arith.constant 0 : index
    %93 = vector.load %arg8[%c0_24, %c0_25, %c0_26] : memref<1x32x64xbf16, #tpu.memory_space<vmem>>, vector<1x32x64xbf16>
    %94 = vector.shape_cast %93 : vector<1x32x64xbf16> to vector<32x64xbf16>
    %95 = arith.truncf %92 : vector<8x32xf32> to vector<8x32xbf16>
    %cst_27 = arith.constant dense<0.000000e+00> : vector<8x64xf32>
    %96 = tpu.matmul %95, %94, %cst_27 {dimension_numbers = #tpu.dot_dimension_numbers<[1], [0], [0], [1], [0, 0, 1, 1], [], []>} : vector<8x32xbf16>, vector<32x64xbf16>, vector<8x64xf32> -> vector<8x64xf32>
    %97 = vector.broadcast %10 : vector<1x64xf32> to vector<8x64xf32>
    %98 = arith.addf %96, %97 : vector<8x64xf32>
    %99 = arith.mulf %98, %98 : vector<8x64xf32>
    %100 = arith.mulf %98, %99 : vector<8x64xf32>
    %cst_28 = arith.constant 4.471500e-02 : f32
    %101 = vector.broadcast %cst_28 : f32 to vector<8x64xf32>
    %102 = arith.mulf %101, %100 : vector<8x64xf32>
    %103 = arith.addf %98, %102 : vector<8x64xf32>
    %cst_29 = arith.constant 0.797884583 : f32
    %104 = vector.broadcast %cst_29 : f32 to vector<8x64xf32>
    %105 = arith.mulf %104, %103 : vector<8x64xf32>
    %106 = math.tanh %105 : vector<8x64xf32>
    %cst_30 = arith.constant 1.000000e+00 : f32
    %107 = vector.broadcast %cst_30 : f32 to vector<8x64xf32>
    %108 = arith.addf %107, %106 : vector<8x64xf32>
    %cst_31 = arith.constant 5.000000e-01 : f32
    %109 = vector.broadcast %cst_31 : f32 to vector<8x64xf32>
    %110 = arith.mulf %109, %108 : vector<8x64xf32>
    %111 = arith.mulf %98, %110 : vector<8x64xf32>
    %c0_32 = arith.constant 0 : index
    %c0_33 = arith.constant 0 : index
    %c0_34 = arith.constant 0 : index
    %112 = vector.load %arg9[%c0_32, %c0_33, %c0_34] : memref<1x64x32xbf16, #tpu.memory_space<vmem>>, vector<1x64x32xbf16>
    %113 = vector.shape_cast %112 : vector<1x64x32xbf16> to vector<64x32xbf16>
    %114 = arith.truncf %111 : vector<8x64xf32> to vector<8x64xbf16>
    %cst_35 = arith.constant dense<0.000000e+00> : vector<8x32xf32>
    %115 = tpu.matmul %114, %113, %cst_35 {dimension_numbers = #tpu.dot_dimension_numbers<[1], [0], [0], [1], [0, 0, 1, 1], [], []>} : vector<8x64xbf16>, vector<64x32xbf16>, vector<8x32xf32> -> vector<8x32xf32>
    %116 = vector.broadcast %11 : vector<1x32xf32> to vector<8x32xf32>
    %117 = arith.addf %115, %116 : vector<8x32xf32>
    %118 = arith.addf %92, %117 : vector<8x32xf32>
    %cst_36 = arith.constant dense<0.000000e+00> : vector<8xf32>
    %119 = vector.multi_reduction <add>, %118, %cst_36 [1] : vector<8x32xf32> to vector<8xf32>
    %120 = vector.shape_cast %119 : vector<8xf32> to vector<8x1xf32>
    %cst_37 = arith.constant 3.200000e+01 : f32
    %121 = vector.broadcast %cst_37 : f32 to vector<8x1xf32>
    %122 = arith.divf %120, %121 : vector<8x1xf32>
    %123 = vector.broadcast %122 : vector<8x1xf32> to vector<8x32xf32>
    %124 = arith.subf %118, %123 : vector<8x32xf32>
    %125 = arith.mulf %124, %124 : vector<8x32xf32>
    %cst_38 = arith.constant dense<0.000000e+00> : vector<8xf32>
    %126 = vector.multi_reduction <add>, %125, %cst_38 [1] : vector<8x32xf32> to vector<8xf32>
    %127 = vector.shape_cast %126 : vector<8xf32> to vector<8x1xf32>
    %cst_39 = arith.constant 3.200000e+01 : f32
    %128 = vector.broadcast %cst_39 : f32 to vector<8x1xf32>
    %129 = arith.divf %127, %128 : vector<8x1xf32>
    %130 = vector.broadcast %122 : vector<8x1xf32> to vector<8x32xf32>
    %131 = arith.subf %118, %130 : vector<8x32xf32>
    %cst_40 = arith.constant 9.99999996E-13 : f32
    %132 = vector.broadcast %cst_40 : f32 to vector<8x1xf32>
    %133 = arith.addf %129, %132 : vector<8x1xf32>
    %134 = math.rsqrt %133 : vector<8x1xf32>
    %135 = vector.broadcast %134 : vector<8x1xf32> to vector<8x32xf32>
    %136 = arith.mulf %131, %135 : vector<8x32xf32>
    %137 = vector.broadcast %12 : vector<1x32xf32> to vector<8x32xf32>
    %138 = arith.mulf %136, %137 : vector<8x32xf32>
    %139 = vector.broadcast %13 : vector<1x32xf32> to vector<8x32xf32>
    %140 = arith.addf %138, %139 : vector<8x32xf32>
    %c0_41 = arith.constant 0 : index
    %c0_42 = arith.constant 0 : index
    %141 = vector.load %arg12[%c0_41, %c0_42] : memref<8x32xf32, #tpu.memory_space<vmem>>, vector<8x32xf32>
    tpu.vector_store %arg12[%c0_41, %c0_42], %140 {strides = array<i32>} : memref<8x32xf32, #tpu.memory_space<vmem>>, vector<8x32xf32>,
    %c1_i32 = arith.constant 1 : i32
    %142 = arith.cmpi eq, %arg1, %c1_i32 : i32
    %143 = arith.extui %142 : i1 to i32
    %c0_i32_43 = arith.constant 0 : i32
    %144 = arith.cmpi ne, %143, %c0_i32_43 : i32
    scf.if %144 {
      %145 = vector.extract_strided_slice %140 {offsets = [0, 0], sizes = [1, 32], strides = [1, 1]} : vector<8x32xf32> to vector<1x32xf32>
      %c0_44 = arith.constant 0 : index
      %c0_45 = arith.constant 0 : index
      %c0_46 = arith.constant 0 : index
      %146 = vector.load %arg11[%c0_44, %c0_45, %c0_46] : memref<1x1x32xf32, #tpu.memory_space<vmem>>, vector<1x1x32xf32>
      %147 = vector.shape_cast %146 : vector<1x1x32xf32> to vector<1x32xf32>
      %148 = vector.shape_cast %145 : vector<1x32xf32> to vector<1x1x32xf32>
      tpu.vector_store %arg11[%c0_44, %c0_45, %c0_46], %148 {strides = array<i32>} : memref<1x1x32xf32, #tpu.memory_space<vmem>>, vector<1x1x32xf32>,
    } else {
    }
    return
  }
  func.func @transform_0(%arg0: i32, %arg1: i32) -> (i32, i32, i32) {
    %c0_i32 = arith.constant 0 : i32
    %c0_i32_0 = arith.constant 0 : i32
    %c0_i32_1 = arith.constant 0 : i32
    return %arg0, %c0_i32, %c0_i32_0 : i32, i32, i32
  }
  func.func @transform_1(%arg0: i32, %arg1: i32) -> (i32, i32, i32) {
    %c0_i32 = arith.constant 0 : i32
    %c0_i32_0 = arith.constant 0 : i32
    %c0_i32_1 = arith.constant 0 : i32
    return %arg0, %c0_i32, %c0_i32_0 : i32, i32, i32
  }
  func.func @transform_2(%arg0: i32, %arg1: i32) -> (i32, i32) {
    %c0_i32 = arith.constant 0 : i32
    %c0_i32_0 = arith.constant 0 : i32
    %c0_i32_1 = arith.constant 0 : i32
    return %c0_i32, %c0_i32_0 : i32, i32
  }
  func.func @transform_3(%arg0: i32, %arg1: i32) -> (i32, i32) {
    %c0_i32 = arith.constant 0 : i32
    %c0_i32_0 = arith.constant 0 : i32
    %c0_i32_1 = arith.constant 0 : i32
    return %c0_i32, %c0_i32_0 : i32, i32
  }
  func.func @transform_4(%arg0: i32, %arg1: i32) -> (i32, i32, i32) {
    %c0_i32 = arith.constant 0 : i32
    %c0_i32_0 = arith.constant 0 : i32
    %c0_i32_1 = arith.constant 0 : i32
    return %arg1, %c0_i32, %c0_i32_0 : i32, i32, i32
  }
  func.func @transform_5(%arg0: i32, %arg1: i32) -> (i32, i32, i32) {
    %c0_i32 = arith.constant 0 : i32
    %c0_i32_0 = arith.constant 0 : i32
    %c0_i32_1 = arith.constant 0 : i32
    return %arg1, %c0_i32, %c0_i32_0 : i32, i32, i32
  }
  func.func @transform_6(%arg0: i32, %arg1: i32) -> (i32, i32, i32) {
    %c0_i32 = arith.constant 0 : i32
    %c0_i32_0 = arith.constant 0 : i32
    %c0_i32_1 = arith.constant 0 : i32
    return %arg1, %c0_i32, %c0_i32_0 : i32, i32, i32
  }
  func.func @transform_7(%arg0: i32, %arg1: i32) -> (i32, i32, i32) {
    %c0_i32 = arith.constant 0 : i32
    %c0_i32_0 = arith.constant 0 : i32
    %c0_i32_1 = arith.constant 0 : i32
    return %arg1, %c0_i32, %c0_i32_0 : i32, i32, i32
  }
  func.func @transform_8(%arg0: i32, %arg1: i32) -> (i32, i32, i32) {
    %c0_i32 = arith.constant 0 : i32
    %c0_i32_0 = arith.constant 0 : i32
    %c0_i32_1 = arith.constant 0 : i32
    return %arg1, %c0_i32, %c0_i32_0 : i32, i32, i32
  }
  func.func @transform_9(%arg0: i32, %arg1: i32) -> (i32, i32, i32) {
    %c0_i32 = arith.constant 0 : i32
    %c0_i32_0 = arith.constant 0 : i32
    %c0_i32_1 = arith.constant 0 : i32
    return %arg0, %c0_i32, %c0_i32_0 : i32, i32, i32
  }
}

</mosaic_0001>

<llo_original>
// kernel: rank_encoder_forward.1
$region0: #{rank_encoder_forward.1}
  #allocation0 [shape = 'u32[]', space=smem, size = 0x4, offset = 0x4, fixed_abs, tag = 'smem constant byte address 0x4 - core index']
  #allocation1 [shape = 'u32[72,128]{1,0:T(1,128)}', space=vmem, size = 0x9000, scoped, tag = 'internal scratch']
  #allocation2 [shape = 'f32[8,32]{1,0:T(8,128)}', space=vmem, size = 0x1000, scoped, tag = 'scratch operand']
  %s0 = inlined_call_operand.vmem [shape: f32[2,8,32], index: 0, kind: input, shape index: {}]
  %s1 = inlined_call_operand.vmem [shape: f32[2,1,8], index: 1, kind: input, shape index: {}]
  %s2 = inlined_call_operand.vmem [shape: f32[1,32], index: 2, kind: input, shape index: {}]
  %s3 = inlined_call_operand.vmem [shape: f32[1,32], index: 3, kind: input, shape index: {}]
  %s4 = inlined_call_operand.vmem [shape: bf16[2,32,96], index: 4, kind: input, shape index: {}]
  %s5 = inlined_call_operand.vmem [shape: bf16[2,32,32], index: 5, kind: input, shape index: {}]
  %s6 = inlined_call_operand.vmem [shape: bf16[2,32,64], index: 6, kind: input, shape index: {}]
  %s7 = inlined_call_operand.vmem [shape: bf16[2,64,32], index: 7, kind: input, shape index: {}]
  %s8 = inlined_call_operand.vmem [shape: f32[2,8,96], index: 8, kind: input, shape index: {}]
  %s9 = inlined_call_operand.vmem [shape: f32[2,1,32], index: 9, kind: output, shape index: {}]
  %s10 = sld [smem:[#allocation0]]
  $region77: #{rank_encoder_forward.1} parent=0
    _
  %s12 = ssub.s32 1, %s10
  %s13 = scalar_select 0, %s12, %s10
  loop: start=0, step=1, limit=6
  $region2: #{rank_encoder_forward.1} parent=0 // loop_pre_header
    _
  $region3: #{rank_encoder_forward.1} parent=0 // loop_header
    %s15 = sphi 0, %s19
    %p16 = scmp.ge.s32.totalorder %s15, 6
    %s22 = sphi 0, %s34
    %s23 = sphi 0, %s30
    %s24 = sphi 0, %s22
    %s25 = sphi 0, %s23
    %s26 = sphi 0, %s24
    %s27 = sphi 0, %s25
    %s37 = sphi 0, %s39
    %s40 = sphi 0, %s37
    %s41 = sphi 0, %s40
    %s57 = sphi 0, %s41
    %s63 = sphi 0, %s65
    %s66 = sphi 0, %s63
    %s67 = sphi 0, %s66
    %s83 = sphi 0, %s67
    %s87 = sphi 0, %s87
    %s89 = sphi 0, %s87
    %s90 = sphi 0, %s89
    %s104 = sphi 0, %s90
    %s108 = sphi 0, %s108
    %s110 = sphi 0, %s108
    %s111 = sphi 0, %s110
    %s125 = sphi 0, %s111
    %s131 = sphi 0, %s133
    %s134 = sphi 0, %s131
    %s135 = sphi 0, %s134
    %s151 = sphi 0, %s135
    %s157 = sphi 0, %s159
    %s160 = sphi 0, %s157
    %s161 = sphi 0, %s160
    %s177 = sphi 0, %s161
    %s183 = sphi 0, %s185
    %s186 = sphi 0, %s183
    %s187 = sphi 0, %s186
    %s203 = sphi 0, %s187
    %s209 = sphi 0, %s211
    %s212 = sphi 0, %s209
    %s213 = sphi 0, %s212
    %s229 = sphi 0, %s213
    %s235 = sphi 0, %s237
    %s238 = sphi 0, %s235
    %s239 = sphi 0, %s238
    %s255 = sphi 0, %s239
    %s261 = sphi 0, %s263
    %s264 = sphi 0, %s261
    %s265 = sphi 0, %s264
    %s281 = sphi 0, %s265
  $region4: #{rank_encoder_forward.1} parent=0 // loop_header_branch
    %18 = sbr.rel (%p16) target = $region8
  $region5: #{rank_encoder_forward.1} parent=0 // loop_body
    %s20 = ssub.s32 %s15, 1
    %s21 = ssub.s32 %s15, 2
    %s28 = sadd.s32 1, %s23
    %p29 = scmp.ge.s32.totalorder %s28, 2
    %s30 = scalar_select %p29, 0, %s28
    %s31 = sadd.s32 1, %s22
    %s32 = scalar_select %p29, %s31, %s22
    %p33 = scmp.ge.s32.totalorder %s32, 2
    %s34 = scalar_select %p33, 0, %s32
    %s35 = ssub.s32 %s22, %s34
    %p36 = scmp.eq.s32.totalorder %s35, 0
    %s38 = sadd.s32 %s37, 1
    %s39 = scalar_select %p36, %s37, %s38
    %p42 = pneg %p36
    %p43 = scmp.eq.s32.totalorder %s15, 3
    %p44 = por %p42, %p43
    %p45 = scmp.ne.s32.totalorder %s37, %s40
    %p46 = scmp.eq.s32.totalorder %s15, 0
    %p47 = por %p45, %p46
    %p48 = scmp.ne.s32.totalorder %s37, %s40
    %p49 = scmp.eq.s32.totalorder %s20, 3
    %p50 = por %p48, %p49
    %p51 = scmp.ne.s32.totalorder %s40, %s41
    %p52 = scmp.eq.s32.totalorder %s20, 0
    %p53 = por %p51, %p52
    %p54 = scmp.ne.s32.totalorder %s40, %s41
    %p55 = scmp.eq.s32.totalorder %s21, 3
    %p56 = por %p54, %p55
    %p58 = scmp.ne.s32.totalorder %s41, %s57
    %p59 = scmp.eq.s32.totalorder %s21, 0
    %p60 = por %p58, %p59
    %s61 = ssub.s32 %s22, %s34
    %p62 = scmp.eq.s32.totalorder %s61, 0
    %s64 = sadd.s32 %s63, 1
    %s65 = scalar_select %p62, %s63, %s64
    %p68 = pneg %p62
    %p69 = scmp.eq.s32.totalorder %s15, 3
    %p70 = por %p68, %p69
    %p71 = scmp.ne.s32.totalorder %s63, %s66
    %p72 = scmp.eq.s32.totalorder %s15, 0
    %p73 = por %p71, %p72
    %p74 = scmp.ne.s32.totalorder %s63, %s66
    %p75 = scmp.eq.s32.totalorder %s20, 3
    %p76 = por %p74, %p75
    %p77 = scmp.ne.s32.totalorder %s66, %s67
    %p78 = scmp.eq.s32.totalorder %s20, 0
    %p79 = por %p77, %p78
    %p80 = scmp.ne.s32.totalorder %s66, %s67
    %p81 = scmp.eq.s32.totalorder %s21, 3
    %p82 = por %p80, %p81
    %p84 = scmp.ne.s32.totalorder %s67, %s83
    %p85 = scmp.eq.s32.totalorder %s21, 0
    %p86 = por %p84, %p85
    %s88 = sadd.s32 %s87, 1
    %p91 = scmp.eq.s32.totalorder %s15, 3
    %p92 = scmp.ne.s32.totalorder %s87, %s89
    %p93 = scmp.eq.s32.totalorder %s15, 0
    %p94 = por %p92, %p93
    %p95 = scmp.ne.s32.totalorder %s87, %s89
    %p96 = scmp.eq.s32.totalorder %s20, 3
    %p97 = por %p95, %p96
    %p98 = scmp.ne.s32.totalorder %s89, %s90
    %p99 = scmp.eq.s32.totalorder %s20, 0
    %p100 = por %p98, %p99
    %p101 = scmp.ne.s32.totalorder %s89, %s90
    %p102 = scmp.eq.s32.totalorder %s21, 3
    %p103 = por %p101, %p102
    %p105 = scmp.ne.s32.totalorder %s90, %s104
    %p106 = scmp.eq.s32.totalorder %s21, 0
    %p107 = por %p105, %p106
    %s109 = sadd.s32 %s108, 1
    %p112 = scmp.eq.s32.totalorder %s15, 3
    %p113 = scmp.ne.s32.totalorder %s108, %s110
    %p114 = scmp.eq.s32.totalorder %s15, 0
    %p115 = por %p113, %p114
    %p116 = scmp.ne.s32.totalorder %s108, %s110
    %p117 = scmp.eq.s32.totalorder %s20, 3
    %p118 = por %p116, %p117
    %p119 = scmp.ne.s32.totalorder %s110, %s111
    %p120 = scmp.eq.s32.totalorder %s20, 0
    %p121 = por %p119, %p120
    %p122 = scmp.ne.s32.totalorder %s110, %s111
    %p123 = scmp.eq.s32.totalorder %s21, 3
    %p124 = por %p122, %p123
    %p126 = scmp.ne.s32.totalorder %s111, %s125
    %p127 = scmp.eq.s32.totalorder %s21, 0
    %p128 = por %p126, %p127
    %s129 = ssub.s32 %s23, %s30
    %p130 = scmp.eq.s32.totalorder %s129, 0
    %s132 = sadd.s32 %s131, 1
    %s133 = scalar_select %p130, %s131, %s132
    %p136 = pneg %p130
    %p137 = scmp.eq.s32.totalorder %s15, 3
    %p138 = por %p136, %p137
    %p139 = scmp.ne.s32.totalorder %s131, %s134
    %p140 = scmp.eq.s32.totalorder %s15, 0
    %p141 = por %p139, %p140
    %p142 = scmp.ne.s32.totalorder %s131, %s134
    %p143 = scmp.eq.s32.totalorder %s20, 3
    %p144 = por %p142, %p143
    %p145 = scmp.ne.s32.totalorder %s134, %s135
    %p146 = scmp.eq.s32.totalorder %s20, 0
    %p147 = por %p145, %p146
    %p148 = scmp.ne.s32.totalorder %s134, %s135
    %p149 = scmp.eq.s32.totalorder %s21, 3
    %p150 = por %p148, %p149
    %p152 = scmp.ne.s32.totalorder %s135, %s151
    %p153 = scmp.eq.s32.totalorder %s21, 0
    %p154 = por %p152, %p153
    %s155 = ssub.s32 %s23, %s30
    %p156 = scmp.eq.s32.totalorder %s155, 0
    %s158 = sadd.s32 %s157, 1
    %s159 = scalar_select %p156, %s157, %s158
    %p162 = pneg %p156
    %p163 = scmp.eq.s32.totalorder %s15, 3
    %p164 = por %p162, %p163
    %p165 = scmp.ne.s32.totalorder %s157, %s160
    %p166 = scmp.eq.s32.totalorder %s15, 0
    %p167 = por %p165, %p166
    %p168 = scmp.ne.s32.totalorder %s157, %s160
    %p169 = scmp.eq.s32.totalorder %s20, 3
    %p170 = por %p168, %p169
    %p171 = scmp.ne.s32.totalorder %s160, %s161
    %p172 = scmp.eq.s32.totalorder %s20, 0
    %p173 = por %p171, %p172
    %p174 = scmp.ne.s32.totalorder %s160, %s161
    %p175 = scmp.eq.s32.totalorder %s21, 3
    %p176 = por %p174, %p175
    %p178 = scmp.ne.s32.totalorder %s161, %s177
    %p179 = scmp.eq.s32.totalorder %s21, 0
    %p180 = por %p178, %p179
    %s181 = ssub.s32 %s23, %s30
    %p182 = scmp.eq.s32.totalorder %s181, 0
    %s184 = sadd.s32 %s183, 1
    %s185 = scalar_select %p182, %s183, %s184
    %p188 = pneg %p182
    %p189 = scmp.eq.s32.totalorder %s15, 3
    %p190 = por %p188, %p189
    %p191 = scmp.ne.s32.totalorder %s183, %s186
    %p192 = scmp.eq.s32.totalorder %s15, 0
    %p193 = por %p191, %p192
    %p194 = scmp.ne.s32.totalorder %s183, %s186
    %p195 = scmp.eq.s32.totalorder %s20, 3
    %p196 = por %p194, %p195
    %p197 = scmp.ne.s32.totalorder %s186, %s187
    %p198 = scmp.eq.s32.totalorder %s20, 0
    %p199 = por %p197, %p198
    %p200 = scmp.ne.s32.totalorder %s186, %s187
    %p201 = scmp.eq.s32.totalorder %s21, 3
    %p202 = por %p200, %p201
    %p204 = scmp.ne.s32.totalorder %s187, %s203
    %p205 = scmp.eq.s32.totalorder %s21, 0
    %p206 = por %p204, %p205
    %s207 = ssub.s32 %s23, %s30
    %p208 = scmp.eq.s32.totalorder %s207, 0
    %s210 = sadd.s32 %s209, 1
    %s211 = scalar_select %p208, %s209, %s210
    %p214 = pneg %p208
    %p215 = scmp.eq.s32.totalorder %s15, 3
    %p216 = por %p214, %p215
    %p217 = scmp.ne.s32.totalorder %s209, %s212
    %p218 = scmp.eq.s32.totalorder %s15, 0
    %p219 = por %p217, %p218
    %p220 = scmp.ne.s32.totalorder %s209, %s212
    %p221 = scmp.eq.s32.totalorder %s20, 3
    %p222 = por %p220, %p221
    %p223 = scmp.ne.s32.totalorder %s212, %s213
    %p224 = scmp.eq.s32.totalorder %s20, 0
    %p225 = por %p223, %p224
    %p226 = scmp.ne.s32.totalorder %s212, %s213
    %p227 = scmp.eq.s32.totalorder %s21, 3
    %p228 = por %p226, %p227
    %p230 = scmp.ne.s32.totalorder %s213, %s229
    %p231 = scmp.eq.s32.totalorder %s21, 0
    %p232 = por %p230, %p231
    %s233 = ssub.s32 %s23, %s30
    %p234 = scmp.eq.s32.totalorder %s233, 0
    %s236 = sadd.s32 %s235, 1
    %s237 = scalar_select %p234, %s235, %s236
    %p240 = pneg %p234
    %p241 = scmp.eq.s32.totalorder %s15, 3
    %p242 = por %p240, %p241
    %p243 = scmp.ne.s32.totalorder %s235, %s238
    %p244 = scmp.eq.s32.totalorder %s15, 0
    %p245 = por %p243, %p244
    %p246 = scmp.ne.s32.totalorder %s235, %s238
    %p247 = scmp.eq.s32.totalorder %s20, 3
    %p248 = por %p246, %p247
    %p249 = scmp.ne.s32.totalorder %s238, %s239
    %p250 = scmp.eq.s32.totalorder %s20, 0
    %p251 = por %p249, %p250
    %p252 = scmp.ne.s32.totalorder %s238, %s239
    %p253 = scmp.eq.s32.totalorder %s21, 3
    %p254 = por %p252, %p253
    %p256 = scmp.ne.s32.totalorder %s239, %s255
    %p257 = scmp.eq.s32.totalorder %s21, 0
    %p258 = por %p256, %p257
    %s259 = ssub.s32 %s22, %s34
    %p260 = scmp.eq.s32.totalorder %s259, 0
    %s262 = sadd.s32 %s261, 1
    %s263 = scalar_select %p260, %s261, %s262
    %p266 = pneg %p260
    %p267 = scmp.eq.s32.totalorder %s15, 3
    %p268 = por %p266, %p267
    %p269 = scmp.ne.s32.totalorder %s261, %s264
    %p270 = scmp.eq.s32.totalorder %s15, 0
    %p271 = por %p269, %p270
    %p272 = scmp.ne.s32.totalorder %s261, %s264
    %p273 = scmp.eq.s32.totalorder %s20, 3
    %p274 = por %p272, %p273
    %p275 = scmp.ne.s32.totalorder %s264, %s265
    %p276 = scmp.eq.s32.totalorder %s20, 0
    %p277 = por %p275, %p276
    %p278 = scmp.ne.s32.totalorder %s264, %s265
    %p279 = scmp.eq.s32.totalorder %s21, 3
    %p280 = por %p278, %p279
    %p282 = scmp.ne.s32.totalorder %s265, %s281
    %p283 = scmp.eq.s32.totalorder %s21, 0
    %p284 = por %p282, %p283
    %p285 = scmp.le.s32.totalorder 1, %s15
    %p286 = scmp.lt.s32.totalorder %s15, 5
    %p287 = pnand %p285, %p286
    %p288 = pneg %p287
    // Predicated region
    $region9: #{rank_encoder_forward.1} parent=5 // pred_check
      _
    $region10: #{rank_encoder_forward.1} parent=5 // pred_check_branch
      %290 = sbr.rel (%p287) target = $region12
    $region11: #{rank_encoder_forward.1} parent=5 // pred_region
      %s291 = ssub.s32 %s15, 1
      // Predicated region
      $region13: #{rank_encoder_forward.1} parent=11 // pred_check
        %p292 = pneg %p100
      $region14: #{rank_encoder_forward.1} parent=11 // pred_check_branch
        %294 = sbr.rel (%p292) target = $region16
      $region15: #{rank_encoder_forward.1} parent=11 // pred_region
        _
      $region16: #{rank_encoder_forward.1} parent=11 // pred_fallthru
        _
      // Predicated region
      $region17: #{rank_encoder_forward.1} parent=11 // pred_check
        %p295 = pneg %p121
      $region18: #{rank_encoder_forward.1} parent=11 // pred_check_branch
        %297 = sbr.rel (%p295) target = $region20
      $region19: #{rank_encoder_forward.1} parent=11 // pred_region
        _
      $region20: #{rank_encoder_forward.1} parent=11 // pred_fallthru
        _
    $region12: #{rank_encoder_forward.1} parent=5 // pred_fallthru
      _
    %p298 = scmp.lt.s32.totalorder %s15, 4
    // Predicated region
    $region21: #{rank_encoder_forward.1} parent=5 // pred_check
      %p299 = pneg %p298
    $region22: #{rank_encoder_forward.1} parent=5 // pred_check_branch
      %301 = sbr.rel (%p299) target = $region24
    $region23: #{rank_encoder_forward.1} parent=5 // pred_region
      // Predicated region
      $region25: #{rank_encoder_forward.1} parent=23 // pred_check
        %p302 = pneg %p47
      $region26: #{rank_encoder_forward.1} parent=23 // pred_check_branch
        %304 = sbr.rel (%p302) target = $region28
      $region27: #{rank_encoder_forward.1} parent=23 // pred_region
        %p305 = scmp.lt.s32.totalorder %s22, 1
        %s306 = scalar_select %p305, %s22, 1
        %s307 = smul.addr %s306, 8
        %s308 = scalar_lea.vmem %s0, %s307
      $region28: #{rank_encoder_forward.1} parent=23 // pred_fallthru
        _
      // Predicated region
      $region29: #{rank_encoder_forward.1} parent=23 // pred_check
        %p309 = pneg %p73
      $region30: #{rank_encoder_forward.1} parent=23 // pred_check_branch
        %311 = sbr.rel (%p309) target = $region32
      $region31: #{rank_encoder_forward.1} parent=23 // pred_region
        %p312 = scmp.lt.s32.totalorder %s22, 1
        %s313 = scalar_select %p312, %s22, 1
        %s314 = scalar_lea.vmem %s1, %s313
      $region32: #{rank_encoder_forward.1} parent=23 // pred_fallthru
        _
      // Predicated region
      $region33: #{rank_encoder_forward.1} parent=23 // pred_check
        %p315 = pneg %p141
      $region34: #{rank_encoder_forward.1} parent=23 // pred_check_branch
        %317 = sbr.rel (%p315) target = $region36
      $region35: #{rank_encoder_forward.1} parent=23 // pred_region
        %p318 = scmp.lt.s32.totalorder %s23, 1
        %s319 = scalar_select %p318, %s23, 1
        %s320 = smul.addr %s319, 4
        %s321 = smul.addr %s320, 4
        %s322 = scalar_lea.vmem %s4, %s321
      $region36: #{rank_encoder_forward.1} parent=23 // pred_fallthru
        _
      // Predicated region
      $region37: #{rank_encoder_forward.1} parent=23 // pred_check
        %p323 = pneg %p167
      $region38: #{rank_encoder_forward.1} parent=23 // pred_check_branch
        %325 = sbr.rel (%p323) target = $region40
      $region39: #{rank_encoder_forward.1} parent=23 // pred_region
        %p326 = scmp.lt.s32.totalorder %s23, 1
        %s327 = scalar_select %p326, %s23, 1
        %s328 = smul.addr %s327, 4
        %s329 = smul.addr %s328, 4
        %s330 = scalar_lea.vmem %s5, %s329
      $region40: #{rank_encoder_forward.1} parent=23 // pred_fallthru
        _
      // Predicated region
      $region41: #{rank_encoder_forward.1} parent=23 // pred_check
        %p331 = pneg %p193
      $region42: #{rank_encoder_forward.1} parent=23 // pred_check_branch
        %333 = sbr.rel (%p331) target = $region44
      $region43: #{rank_encoder_forward.1} parent=23 // pred_region
        %p334 = scmp.lt.s32.totalorder %s23, 1
        %s335 = scalar_select %p334, %s23, 1
        %s336 = smul.addr %s335, 4
        %s337 = smul.addr %s336, 4
        %s338 = scalar_lea.vmem %s6, %s337
      $region44: #{rank_encoder_forward.1} parent=23 // pred_fallthru
        _
      // Predicated region
      $region45: #{rank_encoder_forward.1} parent=23 // pred_check
        %p339 = pneg %p219
      $region46: #{rank_encoder_forward.1} parent=23 // pred_check_branch
        %341 = sbr.rel (%p339) target = $region48
      $region47: #{rank_encoder_forward.1} parent=23 // pred_region
        %p342 = scmp.lt.s32.totalorder %s23, 1
        %s343 = scalar_select %p342, %s23, 1
        %s344 = smul.addr %s343, 8
        %s345 = smul.addr %s344, 4
        %s346 = scalar_lea.vmem %s7, %s345
      $region48: #{rank_encoder_forward.1} parent=23 // pred_fallthru
        _
      // Predicated region
      $region49: #{rank_encoder_forward.1} parent=23 // pred_check
        %p347 = pneg %p245
      $region50: #{rank_encoder_forward.1} parent=23 // pred_check_branch
        %349 = sbr.rel (%p347) target = $region52
      $region51: #{rank_encoder_forward.1} parent=23 // pred_region
        %p350 = scmp.lt.s32.totalorder %s23, 1
        %s351 = scalar_select %p350, %s23, 1
        %s352 = smul.addr %s351, 8
        %s353 = scalar_lea.vmem %s8, %s352
      $region52: #{rank_encoder_forward.1} parent=23 // pred_fallthru
        _
    $region24: #{rank_encoder_forward.1} parent=5 // pred_fallthru
      _
    %p354 = scmp.le.s32.totalorder 1, %s15
    %p355 = scmp.lt.s32.totalorder %s15, 5
    %p356 = pnand %p354, %p355
    %p357 = pneg %p356
    // Predicated region
    $region53: #{rank_encoder_forward.1} parent=5 // pred_check
      _
    $region54: #{rank_encoder_forward.1} parent=5 // pred_check_branch
      %359 = sbr.rel (%p356) target = $region56
    $region55: #{rank_encoder_forward.1} parent=5 // pred_region
      %s360 = ssub.s32 %s15, 1
      %p361 = scmp.lt.s32.totalorder %s24, 1
      %s362 = scalar_select %p361, %s24, 1
      %s363 = smul.addr %s362, 8
      %s364 = scalar_lea.vmem %s0, %s363
      %p365 = pneg %p53
      %p366 = pneg %p50
      %p367 = scmp.lt.s32.totalorder %s24, 1
      %s368 = scalar_select %p367, %s24, 1
      %s369 = scalar_lea.vmem %s1, %s368
      %p370 = pneg %p79
      %p371 = pneg %p76
      %p372 = pneg %p100
      %p373 = pneg %p97
      %p374 = pneg %p121
      %p375 = pneg %p118
      %p376 = scmp.lt.s32.totalorder %s25, 1
      %s377 = scalar_select %p376, %s25, 1
      %s378 = smul.addr %s377, 4
      %s379 = smul.addr %s378, 4
      %s380 = scalar_lea.vmem %s4, %s379
      %p381 = pneg %p147
      %p382 = pneg %p144
      %p383 = scmp.lt.s32.totalorder %s25, 1
      %s384 = scalar_select %p383, %s25, 1
      %s385 = smul.addr %s384, 4
      %s386 = smul.addr %s385, 4
      %s387 = scalar_lea.vmem %s5, %s386
      %p388 = pneg %p173
      %p389 = pneg %p170
      %p390 = scmp.lt.s32.totalorder %s25, 1
      %s391 = scalar_select %p390, %s25, 1
      %s392 = smul.addr %s391, 4
      %s393 = smul.addr %s392, 4
      %s394 = scalar_lea.vmem %s6, %s393
      %p395 = pneg %p199
      %p396 = pneg %p196
      %p397 = scmp.lt.s32.totalorder %s25, 1
      %s398 = scalar_select %p397, %s25, 1
      %s399 = smul.addr %s398, 8
      %s400 = smul.addr %s399, 4
      %s401 = scalar_lea.vmem %s7, %s400
      %p402 = pneg %p225
      %p403 = pneg %p222
      %p404 = scmp.lt.s32.totalorder %s25, 1
      %s405 = scalar_select %p404, %s25, 1
      %s406 = smul.addr %s405, 8
      %s407 = scalar_lea.vmem %s8, %s406
      %p408 = pneg %p251
      %p409 = pneg %p248
      %p410 = pneg %p277
      %p411 = pneg %p274
      %p412 = scmp.lt.s32.totalorder %s24, 1
      %s413 = scalar_select %p412, %s24, 1
      %s414 = scalar_lea.vmem %s9, %s413
      %p415 = scmp.lt.s32.totalorder %s24, 1
      %s416 = scalar_select %p415, %s24, 1
      %s417 = smul.addr %s416, 8
      %s418 = scalar_lea.vmem %s0, %s417
      %p419 = scmp.lt.s32.totalorder %s24, 1
      %s420 = scalar_select %p419, %s24, 1
      %s421 = scalar_lea.vmem %s1, %s420
      %p422 = scmp.lt.s32.totalorder %s25, 1
      %s423 = scalar_select %p422, %s25, 1
      %s424 = smul.addr %s423, 4
      %s425 = smul.addr %s424, 4
      %s426 = scalar_lea.vmem %s4, %s425
      %p427 = scmp.lt.s32.totalorder %s25, 1
      %s428 = scalar_select %p427, %s25, 1
      %s429 = smul.addr %s428, 4
      %s430 = smul.addr %s429, 4
      %s431 = scalar_lea.vmem %s5, %s430
      %p432 = scmp.lt.s32.totalorder %s25, 1
      %s433 = scalar_select %p432, %s25, 1
      %s434 = smul.addr %s433, 4
      %s435 = smul.addr %s434, 4
      %s436 = scalar_lea.vmem %s6, %s435
      %p437 = scmp.lt.s32.totalorder %s25, 1
      %s438 = scalar_select %p437, %s25, 1
      %s439 = smul.addr %s438, 8
      %s440 = smul.addr %s439, 4
      %s441 = scalar_lea.vmem %s7, %s440
      %p442 = scmp.lt.s32.totalorder %s25, 1
      %s443 = scalar_select %p442, %s25, 1
      %s444 = smul.addr %s443, 8
      %s445 = scalar_lea.vmem %s8, %s444
      %p446 = scmp.lt.s32.totalorder %s24, 1
      %s447 = scalar_select %p446, %s24, 1
      %s448 = scalar_lea.vmem %s9, %s447
      %p450 = scmp.eq.s32.totalorder %s25, 0
      // Predicated region
      $region57: #{rank_encoder_forward.1} parent=55 // pred_check
        %p451 = pneg %p450
      $region58: #{rank_encoder_forward.1} parent=55 // pred_check_branch
        %453 = sbr.rel (%p451) target = $region60
      $region59: #{rank_encoder_forward.1} parent=55 // pred_region
        %v454 = vld [vmem:[%s418] sm:$0xff]
        %v455 = vld [vmem:[%s2] sm:$0x1]
        %v456 = vld [vmem:[%s3] sm:$0x1]
        %vm457 = vcmask 261120
        %v458 = vsel %vm457, %v454, 0.0
        %459 = vadd.xlane.f32.xlu0 %v458
        %v460 = vpop.xlane.xlu0 %459
        %v461 = vrcp.pop 32.0
        %v462 = vmul.f32 32.0, %v461
        %v463 = vsub.f32 1.0, %v462
        %v464 = vmul.f32 %v461, %v463
        %v465 = vadd.f32 %v461, %v464
        %vm466 = vweird.f32 %v461
        %v467 = vsel %vm466, %v461, %v465
        %v468 = vmul.f32 %v460, %v467
        %v469 = vsub.f32 %v454, %v468
        %v470 = vmul.f32 %v469, %v469
        %v471 = vsel %vm457, %v470, 0.0
        %472 = vadd.xlane.f32.xlu0 %v471
        %v473 = vpop.xlane.xlu0 %472
        %v474 = vmul.f32 %v473, %v467
        %v475 = vadd.f32 %v474, 1e-12
        %v476 = vrsqrt.pop %v475
        %v477 = vmul.f32 %v476, %v475
        %v478 = vmul.f32 %v477, %v476
        %v479 = vmul.f32 0.5, %v478
        %v480 = vsub.f32 1.5, %v479
        %v481 = vmul.f32 %v476, %v480
        %vm482 = vweird.f32 %v475
        %vm483 = vweird.f32 %v476
        %vm484 = vmor %vm482, %vm483
        %v485 = vsel %vm484, %v476, %v481
        %v486 = vmul.f32 %v469, %v485
        %v488 = vperm.slane %v455, 0
        %v490 = vmul.f32 %v486, %v488
        %v492 = vperm.slane %v456, 0
        %v494 = vadd.f32 %v490, %v492
        %495 = vst.msk [vmem:[#allocation2] sm:$0xff] %vm457, %v494
      $region60: #{rank_encoder_forward.1} parent=55 // pred_fallthru
        _
      %v496 = vld [vmem:[#allocation2] sm:$0xff]
      %v497 = vld [vmem:[%s445] sm:$0xff]
      %v498 = vld [vmem:[%s426] sm:$0xf]
      %v499 = vld [vmem:[%s426 + $0x4] sm:$0xf]
      %v500 = vld [vmem:[%s426 + $0x8] sm:$0xf]
      %v501 = vld [vmem:[%s426 + $0xc] sm:$0xf]
      %v502 = vpack.c.bf16 %v496, %v496
      %v503 = vperm.slane %v497, 0
      %v508 = vunpack.c.l.b16 %v498
      %v509 = vunpack.c.l.b16 %v499
      %v510 = vunpack.c.l.b16 %v500
      %v511 = vunpack.c.l.b16 %v501
      %v512 = vpack.c.b16 %v509, %v508
      %v513 = vpack.c.b16 %v511, %v510
      %vm516 = vcmask 261120
      %v518 = vsel %vm516, %v502, 0
      %520 = vmatpush.bf16.msra.mxu0 0
      %521 = vmatpush.bf16.msra.mxu0 0
      %522 = vmatpush.bf16.msra.mxu0 0
      %523 = vmatpush.bf16.msra.mxu0 0
      %524 = vmatpush.bf16.msra.mxu0 0
      %525 = vmatpush.bf16.msra.mxu0 0
      %526 = vmatpush.bf16.msra.mxu0 %v513
      %527 = vmatpush.bf16.msra.mxu0 %v512
      %528 = vmatmul.bf16.gmra.mxu0 %v518
      %v529 = vpop.f32.mrf.mxu0
      %v530 = vadd.f32 %v503, %v529
      %v531 = vpop.f32.mrf.mxu0
      %532 = vdwg.mxu0
      %534 = vrot.lane.b32.xlu0 %v530, 112
      %v535 = vpop.permute.xlu0 %534
      %v537 = vpack.c.bf16 %v530, %v530
      %v538 = vpack.c.bf16 %v535, %v535
      %v539 = vld [vmem:[%s421] sm:$0x1]
      %v541 = vperm.slane %v539, 0
      %v544 = vunpack.c.l.b16 %v537
      %v545 = vpack.c.b16 %v544, %v544
      %546 = vrot.lane.b32.xlu0 %v545, 96
      %v547 = vpop.permute.xlu0 %546
      %vm548 = vcmask 130048
      %v550 = vsel %vm548, %v537, 0
      %v553 = vsel %vm548, %v547, 0
      %555 = vmatpush.bf16.xpose.msra.mxu0 0
      %556 = vmatpush.bf16.xpose.msra.mxu0 0
      %557 = vmatpush.bf16.xpose.msra.mxu0 0
      %558 = vmatpush.bf16.xpose.msra.mxu0 0
      %559 = vmatpush.bf16.xpose.msra.mxu0 0
      %560 = vmatpush.bf16.xpose.msra.mxu0 0
      %561 = vmatpush.bf16.xpose.msra.mxu0 0
      %562 = vmatpush.bf16.xpose.msra.mxu0 %v553
      %563 = vmatmul.bf16.gmra.mxu0 %v550
      %v564 = vpop.f32.mrf.mxu0
      %v565 = vadd.f32 %v541, %v564
      %v566 = vpop.f32.mrf.mxu0
      %567 = vdwg.mxu0
      %v569 = vunpack.c.l.b16 %v538
      %v570 = vpack.c.b16 %v569, %v569
      %571 = vrot.lane.b32.xlu0 %v570, 96
      %v572 = vpop.permute.xlu0 %571
      %v574 = vsel %vm548, %v538, 0
      %v577 = vsel %vm548, %v572, 0
      %579 = vmatpush.bf16.xpose.msra.mxu0 0
      %580 = vmatpush.bf16.xpose.msra.mxu0 0
      %581 = vmatpush.bf16.xpose.msra.mxu0 0
      %582 = vmatpush.bf16.xpose.msra.mxu0 0
      %583 = vmatpush.bf16.xpose.msra.mxu0 0
      %584 = vmatpush.bf16.xpose.msra.mxu0 0
      %585 = vmatpush.bf16.xpose.msra.mxu0 0
      %586 = vmatpush.bf16.xpose.msra.mxu0 %v577
      %587 = vmatmul.bf16.gmra.mxu0 %v574
      %v588 = vpop.f32.mrf.mxu0
      %v589 = vadd.f32 %v541, %v588
      %v590 = vpop.f32.mrf.mxu0
      %591 = vdwg.mxu0
      %vm592 = vcmask 64512
      %v593 = vsel %vm592, %v565, -inf
      %594 = vmax.xlane.f32.xlu0 %v593
      %v595 = vpop.xlane.xlu0 %594
      %v596 = vsel %vm592, %v589, -inf
      %597 = vmax.xlane.f32.xlu0 %v596
      %v598 = vpop.xlane.xlu0 %597
      %v599 = vsub.f32 %v565, %v595
      %v600 = vsub.f32 %v589, %v598
      %v601 = vmul.f32 %v599, 1.442695
      %v602 = vpow.pop %v601
      %v603 = vmul.f32 %v600, 1.442695
      %v604 = vpow.pop %v603
      %v605 = vsel %vm592, %v602, 0.0
      %606 = vadd.xlane.f32.xlu0 %v605
      %v607 = vpop.xlane.xlu0 %606
      %v608 = vsel %vm592, %v604, 0.0
      %609 = vadd.xlane.f32.xlu0 %v608
      %v610 = vpop.xlane.xlu0 %609
      %v611 = vrcp.pop %v607
      %v612 = vrcp.pop %v610
      %v613 = vmul.f32 %v602, %v611
      %v614 = vmul.f32 %v604, %v612
      %v615 = vpack.c.bf16 %v613, %v613
      %v616 = vpack.c.bf16 %v614, %v614
      %617 = vrot.lane.b32.xlu0 %v545, 64
      %v618 = vpop.permute.xlu0 %617
      %v620 = vsel %vm592, %v615, 0
      %vm622 = vcmask 1043456
      %v624 = vsel %vm622, %v618, 0
      %626 = vmatpush.bf16.msra.mxu0 0
      %627 = vmatpush.bf16.msra.mxu0 0
      %628 = vmatpush.bf16.msra.mxu0 0
      %629 = vmatpush.bf16.msra.mxu0 0
      %630 = vmatpush.bf16.msra.mxu0 0
      %631 = vmatpush.bf16.msra.mxu0 0
      %632 = vmatpush.bf16.msra.mxu0 0
      %633 = vmatpush.bf16.msra.mxu0 %v624
      %634 = vmatmul.bf16.gmra.mxu0 %v620
      %v635 = vpop.f32.mrf.mxu0
      %v636 = vadd.f32 0.0, %v635
      %v637 = vpop.f32.mrf.mxu0
      %638 = vdwg.mxu0
      %639 = vrot.lane.b32.xlu0 %v570, 64
      %v640 = vpop.permute.xlu0 %639
      %v642 = vsel %vm592, %v616, 0
      %v645 = vsel %vm622, %v640, 0
      %647 = vmatpush.bf16.msra.mxu0 0
      %648 = vmatpush.bf16.msra.mxu0 0
      %649 = vmatpush.bf16.msra.mxu0 0
      %650 = vmatpush.bf16.msra.mxu0 0
      %651 = vmatpush.bf16.msra.mxu0 0
      %652 = vmatpush.bf16.msra.mxu0 0
      %653 = vmatpush.bf16.msra.mxu0 0
      %654 = vmatpush.bf16.msra.mxu0 %v645
      %655 = vmatmul.bf16.gmra.mxu0 %v642
      %v656 = vpop.f32.mrf.mxu0
      %v657 = vadd.f32 0.0, %v656
      %v658 = vpop.f32.mrf.mxu0
      %659 = vdwg.mxu0
      %661 = vrot.lane.b32.xlu0 %v657, 16
      %v662 = vpop.permute.xlu0 %661
      %v664 = vsel %vm548, %v636, %v662
      %v665 = vld [vmem:[%s431] sm:$0xf]
      %v666 = vld [vmem:[%s431 + $0x4] sm:$0xf]
      %v667 = vld [vmem:[%s431 + $0x8] sm:$0xf]
      %v668 = vld [vmem:[%s431 + $0xc] sm:$0xf]
      %v669 = vpack.c.bf16 %v664, %v664
      %v670 = vperm.slane %v497, 1
      %v675 = vunpack.c.l.b16 %v665
      %v676 = vunpack.c.l.b16 %v666
      %v677 = vunpack.c.l.b16 %v667
      %v678 = vunpack.c.l.b16 %v668
      %v679 = vpack.c.b16 %v676, %v675
      %v680 = vpack.c.b16 %v678, %v677
      %v684 = vsel %vm516, %v669, 0
      %686 = vmatpush.bf16.msra.mxu0 0
      %687 = vmatpush.bf16.msra.mxu0 0
      %688 = vmatpush.bf16.msra.mxu0 0
      %689 = vmatpush.bf16.msra.mxu0 0
      %690 = vmatpush.bf16.msra.mxu0 0
      %691 = vmatpush.bf16.msra.mxu0 0
      %692 = vmatpush.bf16.msra.mxu0 %v680
      %693 = vmatpush.bf16.msra.mxu0 %v679
      %694 = vmatmul.bf16.gmra.mxu0 %v684
      %v695 = vpop.f32.mrf.mxu0
      %v696 = vadd.f32 %v670, %v695
      %v697 = vpop.f32.mrf.mxu0
      %698 = vdwg.mxu0
      %v699 = vadd.f32 %v496, %v696
      %v700 = vsel %vm516, %v699, 0.0
      %701 = vadd.xlane.f32.xlu0 %v700
      %v702 = vpop.xlane.xlu0 %701
      %v703 = vrcp.pop 32.0
      %v704 = vmul.f32 32.0, %v703
      %v705 = vsub.f32 1.0, %v704
      %v706 = vmul.f32 %v703, %v705
      %v707 = vadd.f32 %v703, %v706
      %vm708 = vweird.f32 %v703
      %v709 = vsel %vm708, %v703, %v707
      %v710 = vmul.f32 %v702, %v709
      %v711 = vsub.f32 %v699, %v710
      %v712 = vmul.f32 %v711, %v711
      %v713 = vsel %vm516, %v712, 0.0
      %714 = vadd.xlane.f32.xlu0 %v713
      %v715 = vpop.xlane.xlu0 %714
      %v716 = vmul.f32 %v715, %v709
      %v717 = vadd.f32 %v716, 1e-12
      %v718 = vrsqrt.pop %v717
      %v719 = vmul.f32 %v718, %v717
      %v720 = vmul.f32 %v719, %v718
      %v721 = vmul.f32 0.5, %v720
      %v722 = vsub.f32 1.5, %v721
      %v723 = vmul.f32 %v718, %v722
      %vm724 = vweird.f32 %v717
      %vm725 = vweird.f32 %v718
      %vm726 = vmor %vm724, %vm725
      %v727 = vsel %vm726, %v718, %v723
      %v728 = vmul.f32 %v711, %v727
      %v729 = vperm.slane %v497, 2
      %v730 = vmul.f32 %v728, %v729
      %v731 = vperm.slane %v497, 3
      %v732 = vadd.f32 %v730, %v731
      %v733 = vld [vmem:[%s436] sm:$0xf]
      %v734 = vld [vmem:[%s436 + $0x4] sm:$0xf]
      %v735 = vld [vmem:[%s436 + $0x8] sm:$0xf]
      %v736 = vld [vmem:[%s436 + $0xc] sm:$0xf]
      %v737 = vpack.c.bf16 %v732, %v732
      %v738 = vperm.slane %v497, 4
      %v743 = vunpack.c.l.b16 %v733
      %v744 = vunpack.c.l.b16 %v734
      %v745 = vunpack.c.l.b16 %v735
      %v746 = vunpack.c.l.b16 %v736
      %v747 = vpack.c.b16 %v744, %v743
      %v748 = vpack.c.b16 %v746, %v745
      %v752 = vsel %vm516, %v737, 0
      %754 = vmatpush.bf16.msra.mxu0 0
      %755 = vmatpush.bf16.msra.mxu0 0
      %756 = vmatpush.bf16.msra.mxu0 0
      %757 = vmatpush.bf16.msra.mxu0 0
      %758 = vmatpush.bf16.msra.mxu0 0
      %759 = vmatpush.bf16.msra.mxu0 0
      %760 = vmatpush.bf16.msra.mxu0 %v748
      %761 = vmatpush.bf16.msra.mxu0 %v747
      %762 = vmatmul.bf16.gmra.mxu0 %v752
      %v763 = vpop.f32.mrf.mxu0
      %v764 = vadd.f32 %v738, %v763
      %v765 = vpop.f32.mrf.mxu0
      %766 = vdwg.mxu0
      %v767 = vmul.f32 %v764, %v764
      %v768 = vmul.f32 %v764, %v767
      %v769 = vmul.f32 %v768, 0.044715
      %v770 = vadd.f32 %v764, %v769
      %v771 = vmul.f32 %v770, 0.7978846
      %v772 = vtanh.pop %v771
      %v773 = vadd.f32 %v772, 1.0
      %v774 = vmul.f32 %v773, 0.5
      %v775 = vmul.f32 %v764, %v774
      %v776 = vld [vmem:[%s441] sm:$0xf]
      %v777 = vld [vmem:[%s441 + $0x4] sm:$0xf]
      %v778 = vld [vmem:[%s441 + $0x8] sm:$0xf]
      %v779 = vld [vmem:[%s441 + $0xc] sm:$0xf]
      %v780 = vld [vmem:[%s441 + $0x10] sm:$0xf]
      %v781 = vld [vmem:[%s441 + $0x14] sm:$0xf]
      %v782 = vld [vmem:[%s441 + $0x18] sm:$0xf]
      %v783 = vld [vmem:[%s441 + $0x1c] sm:$0xf]
      %v784 = vpack.c.bf16 %v775, %v775
      %v785 = vperm.slane %v497, 5
      %v794 = vunpack.c.l.b16 %v776
      %v795 = vunpack.c.l.b16 %v777
      %v796 = vunpack.c.l.b16 %v778
      %v797 = vunpack.c.l.b16 %v779
      %v798 = vunpack.c.l.b16 %v780
      %v799 = vunpack.c.l.b16 %v781
      %v800 = vunpack.c.l.b16 %v782
      %v801 = vunpack.c.l.b16 %v783
      %v802 = vpack.c.b16 %v795, %v794
      %v803 = vpack.c.b16 %v797, %v796
      %v804 = vpack.c.b16 %v799, %v798
      %v805 = vpack.c.b16 %v801, %v800
      %vm810 = vcmask 523264
      %v812 = vsel %vm810, %v784, 0
      %814 = vmatpush.bf16.msra.mxu0 0
      %815 = vmatpush.bf16.msra.mxu0 0
      %816 = vmatpush.bf16.msra.mxu0 0
      %817 = vmatpush.bf16.msra.mxu0 0
      %818 = vmatpush.bf16.msra.mxu0 %v805
      %819 = vmatpush.bf16.msra.mxu0 %v804
      %820 = vmatpush.bf16.msra.mxu0 %v803
      %821 = vmatpush.bf16.msra.mxu0 %v802
      %822 = vmatmul.bf16.gmra.mxu0 %v812
      %v823 = vpop.f32.mrf.mxu0
      %v824 = vadd.f32 %v785, %v823
      %v825 = vpop.f32.mrf.mxu0
      %826 = vdwg.mxu0
      %v827 = vadd.f32 %v732, %v824
      %v828 = vsel %vm516, %v827, 0.0
      %829 = vadd.xlane.f32.xlu0 %v828
      %v830 = vpop.xlane.xlu0 %829
      %v831 = vmul.f32 %v830, %v709
      %v832 = vsub.f32 %v827, %v831
      %v833 = vmul.f32 %v832, %v832
      %v834 = vsel %vm516, %v833, 0.0
      %835 = vadd.xlane.f32.xlu0 %v834
      %v836 = vpop.xlane.xlu0 %835
      %v837 = vmul.f32 %v836, %v709
      %v838 = vadd.f32 %v837, 1e-12
      %v839 = vrsqrt.pop %v838
      %v840 = vmul.f32 %v839, %v838
      %v841 = vmul.f32 %v840, %v839
      %v842 = vmul.f32 0.5, %v841
      %v843 = vsub.f32 1.5, %v842
      %v844 = vmul.f32 %v839, %v843
      %vm845 = vweird.f32 %v838
      %vm846 = vweird.f32 %v839
      %vm847 = vmor %vm845, %vm846
      %v848 = vsel %vm847, %v839, %v844
      %v849 = vmul.f32 %v832, %v848
      %v850 = vperm.slane %v497, 6
      %v851 = vmul.f32 %v849, %v850
      %v852 = vperm.slane %v497, 7
      %v853 = vadd.f32 %v851, %v852
      %854 = vst.msk [vmem:[#allocation2] sm:$0xff] %vm516, %v853
      %p855 = scmp.eq.s32.totalorder %s25, 1
      // Predicated region
      $region61: #{rank_encoder_forward.1} parent=55 // pred_check
        %p856 = pneg %p855
      $region62: #{rank_encoder_forward.1} parent=55 // pred_check_branch
        %858 = sbr.rel (%p856) target = $region64
      $region63: #{rank_encoder_forward.1} parent=55 // pred_region
        %vm859 = vcmask 253952
        %860 = vst.msk [vmem:[%s448] sm:$0x1] %vm859, %v853
      $region64: #{rank_encoder_forward.1} parent=55 // pred_fallthru
        _
      %p861 = scmp.lt.s32.totalorder %s24, 1
      %s862 = scalar_select %p861, %s24, 1
      %s863 = scalar_lea.vmem %s9, %s862
      // Predicated region
      $region65: #{rank_encoder_forward.1} parent=55 // pred_check
        %p864 = pneg %p274
      $region66: #{rank_encoder_forward.1} parent=55 // pred_check_branch
        %866 = sbr.rel (%p864) target = $region68
      $region67: #{rank_encoder_forward.1} parent=55 // pred_region
        _
      $region68: #{rank_encoder_forward.1} parent=55 // pred_fallthru
        _
    $region56: #{rank_encoder_forward.1} parent=5 // pred_fallthru
      _
    %p867 = scmp.le.s32.totalorder 2, %s15
    // Predicated region
    $region69: #{rank_encoder_forward.1} parent=5 // pred_check
      %p868 = pneg %p867
    $region70: #{rank_encoder_forward.1} parent=5 // pred_check_branch
      %870 = sbr.rel (%p868) target = $region72
    $region71: #{rank_encoder_forward.1} parent=5 // pred_region
      %s871 = ssub.s32 %s15, 2
      // Predicated region
      $region73: #{rank_encoder_forward.1} parent=71 // pred_check
        %p872 = pneg %p280
      $region74: #{rank_encoder_forward.1} parent=71 // pred_check_branch
        %874 = sbr.rel (%p872) target = $region76
      $region75: #{rank_encoder_forward.1} parent=71 // pred_region
        %p875 = scmp.lt.s32.totalorder %s26, 1
        %s876 = scalar_select %p875, %s26, 1
        %s877 = scalar_lea.vmem %s9, %s876
      $region76: #{rank_encoder_forward.1} parent=71 // pred_fallthru
        _
    $region72: #{rank_encoder_forward.1} parent=5 // pred_fallthru
      _
  $region6: #{rank_encoder_forward.1} parent=0 // loop_footer
    %s19 = sadd.s32 1, %s15
  $region7: #{rank_encoder_forward.1} parent=0 // loop_footer_branch
    %14 = sbr.rel target = $region3
  $region8: #{rank_encoder_forward.1} parent=0 // loop_exit
    _

</llo_original>
